<compile_context>
chip_gen: v7x
topology: tpu7x:2x2x1
jax: 0.10.0
libtpu: 0.0.40
codegen_flags: <defaults>
</compile_context>

<pallas_src>
import jax
import jax.numpy as jnp
from jax import lax
from jax.experimental import pallas as pl
from jax.experimental.pallas import tpu as pltpu

S = 8        # sequence length
D_IN = 512   # q/k input feature dim  (nn.Linear in_features)
D_M = 256    # attention / value dim  (nn.Linear out_features)


def _attention_kernel(scale_ref,                       # SMEM: (1,) f32
                      q_in_ref, k_in_ref, v_ref,       # VMEM: (S,512)bf16, (S,512)bf16, (S,256)f32
                      wq_ref, bq_ref, wk_ref, bk_ref,  # VMEM: (512,256)bf16, (1,256)f32, ...
                      mask_ref,                        # VMEM: (S,S) f32, pre-scaled dropout mask
                      o_ref):                          # VMEM: (S,256) f32
    # Linear projections: bf16 operands, f32 accumulation on the MXU.
    q = jnp.dot(q_in_ref[...], wq_ref[...],
                preferred_element_type=jnp.float32) + bq_ref[...]
    k = jnp.dot(k_in_ref[...], wk_ref[...],
                preferred_element_type=jnp.float32) + bk_ref[...]

    # q @ k^T without materializing a transpose: contract the last dims.
    qk = lax.dot_general(q, k, (((1,), (1,)), ((), ())),
                         preferred_element_type=jnp.float32)

    # Scale + softmax along the last dim (f32 throughout).
    s = qk * scale_ref[0]
    m = jnp.max(s, axis=-1, keepdims=True)
    e = jnp.exp(s - m)
    probs = e / jnp.sum(e, axis=-1, keepdims=True)

    # Dropout: mask already carries the 1/(1-p) keep rescale (0 where dropped).
    dropped = probs * mask_ref[...]

    # Attention output.
    out = jnp.dot(dropped, v_ref[...], preferred_element_type=jnp.float32)
    o_ref[...] = out.astype(o_ref.dtype)


def prepare_params(params):
    """One-time param prep (outside the per-call hot path): torch Linear weight
    is (out,in); store it transposed to (in,out) and cast to bf16."""
    return {
        "wq": params["wq"].T.astype(jnp.bfloat16),
        "wk": params["wk"].T.astype(jnp.bfloat16),
        "bq": params["bq"].reshape(1, D_M).astype(jnp.float32),
        "bk": params["bk"].reshape(1, D_M).astype(jnp.float32),
    }


def model_forward(query, key, value, scale_factor, dropout_p, prepared, *, rng_key):
    """query/key: (1, S, 512), value: (1, S, 256), scale_factor: (1,1,1,1),
       dropout_p: (1,). Returns (1, 1, S, 256) f32 (scale_factor's 4-D shape
       broadcasts qk up one rank, as in the torch module)."""
    q2 = query.reshape(S, D_IN).astype(jnp.bfloat16)
    k2 = key.reshape(S, D_IN).astype(jnp.bfloat16)
    v2 = value.reshape(S, D_M).astype(jnp.float32)
    scale = scale_factor.reshape(1).astype(jnp.float32)
    p = dropout_p.reshape(()).astype(jnp.float32)

    # Dropout keep-mask, pre-scaled by 1/(1-p) (F.dropout, training=True).
    # TODO(synk): pltpu.prng_seed/prng_random_bits have no CPU/interpret
    # lowering, so the randoms come from jax.random in the wrapper.
    u = jax.random.uniform(rng_key, (S, S), dtype=jnp.float32)
    mask = jnp.where(u >= p, 1.0 / (1.0 - p), 0.0).astype(jnp.float32)

    vmem = pl.BlockSpec(memory_space=pltpu.MemorySpace.VMEM)
    smem = pl.BlockSpec(memory_space=pltpu.MemorySpace.SMEM)

    out2 = pl.pallas_call(
        _attention_kernel,
        out_shape=jax.ShapeDtypeStruct((S, D_M), jnp.float32),
        in_specs=[smem,                       # scale
                  vmem, vmem, vmem,           # q_in, k_in, value
                  vmem, vmem, vmem, vmem,     # Wq, bq, Wk, bk
                  vmem],                      # dropout mask
        out_specs=vmem,
    )(scale, q2, k2, v2,
      prepared["wq"], prepared["bq"], prepared["wk"], prepared["bk"],
      mask)

    return out2.reshape(1, 1, S, D_M)


if __name__ == "__main__":
    root = jax.random.PRNGKey(0)
    kq, kk, kv, ks, kp, kwq, kbq, kwk, kbk, kdrop = jax.random.split(root, 10)

    # Inputs consistent with the module: Linear(512, 256) => q/k last dim 512.
    query = jax.random.normal(kq, (1, S, D_IN), dtype=jnp.float32)
    key = jax.random.normal(kk, (1, S, D_IN), dtype=jnp.float32)
    value = jax.random.normal(kv, (1, S, D_M), dtype=jnp.float32)
    scale_factor = jax.random.normal(ks, (1, 1, 1, 1), dtype=jnp.float32) + 1.0
    dropout_p = jax.random.uniform(kp, (1,), dtype=jnp.float32)

    # Deterministic parameter init (Kaiming-uniform-like bound 1/sqrt(fan_in)).
    bound = 1.0 / (D_IN ** 0.5)
    params = {
        "wq": jax.random.uniform(kwq, (D_M, D_IN), jnp.float32, -bound, bound),
        "bq": jax.random.uniform(kbq, (D_M,), jnp.float32, -bound, bound),
        "wk": jax.random.uniform(kwk, (D_M, D_IN), jnp.float32, -bound, bound),
        "bk": jax.random.uniform(kbk, (D_M,), jnp.float32, -bound, bound),
    }
    prepared = prepare_params(params)   # one-time transpose + bf16 cast

    out = model_forward(query, key, value, scale_factor, dropout_p, prepared,
                        rng_key=kdrop)
    jax.block_until_ready(out)
    assert out.shape == (1, 1, S, D_M) and out.dtype == jnp.float32
    print("KERNEL_OK")
</pallas_src>

<mosaic_0001>
module attributes {stable_mosaic.version = 11 : i64} {
  func.func @_attention_kernel(%arg0: memref<1xf32, #tpu.memory_space<smem>>, %arg1: memref<8x512xbf16, #tpu.memory_space<vmem>>, %arg2: memref<8x512xbf16, #tpu.memory_space<vmem>>, %arg3: memref<8x256xf32, #tpu.memory_space<vmem>>, %arg4: memref<512x256xbf16, #tpu.memory_space<vmem>>, %arg5: memref<1x256xf32, #tpu.memory_space<vmem>>, %arg6: memref<512x256xbf16, #tpu.memory_space<vmem>>, %arg7: memref<1x256xf32, #tpu.memory_space<vmem>>, %arg8: memref<8x8xf32, #tpu.memory_space<vmem>>, %arg9: memref<8x256xf32, #tpu.memory_space<vmem>>) attributes {dimension_semantics = [], scalar_prefetch = 0 : i64, scratch_operands = 0 : i64, tpu.core_type = #tpu.core_type<tc>} {
    %c0 = arith.constant 0 : index
    %c0_0 = arith.constant 0 : index
    %0 = vector.load %arg1[%c0, %c0_0] : memref<8x512xbf16, #tpu.memory_space<vmem>>, vector<8x512xbf16>
    %c0_1 = arith.constant 0 : index
    %c0_2 = arith.constant 0 : index
    %1 = vector.load %arg4[%c0_1, %c0_2] : memref<512x256xbf16, #tpu.memory_space<vmem>>, vector<512x256xbf16>
    %cst = arith.constant dense<0.000000e+00> : vector<8x256xf32>
    %2 = tpu.matmul %0, %1, %cst {dimension_numbers = #tpu.dot_dimension_numbers<[1], [0], [0], [1], [0, 0, 1, 1], [], []>} : vector<8x512xbf16>, vector<512x256xbf16>, vector<8x256xf32> -> vector<8x256xf32>
    %c0_3 = arith.constant 0 : index
    %c0_4 = arith.constant 0 : index
    %3 = vector.load %arg5[%c0_3, %c0_4] : memref<1x256xf32, #tpu.memory_space<vmem>>, vector<1x256xf32>
    %4 = vector.broadcast %3 : vector<1x256xf32> to vector<8x256xf32>
    %5 = arith.addf %2, %4 : vector<8x256xf32>
    %c0_5 = arith.constant 0 : index
    %c0_6 = arith.constant 0 : index
    %6 = vector.load %arg2[%c0_5, %c0_6] : memref<8x512xbf16, #tpu.memory_space<vmem>>, vector<8x512xbf16>
    %c0_7 = arith.constant 0 : index
    %c0_8 = arith.constant 0 : index
    %7 = vector.load %arg6[%c0_7, %c0_8] : memref<512x256xbf16, #tpu.memory_space<vmem>>, vector<512x256xbf16>
    %cst_9 = arith.constant dense<0.000000e+00> : vector<8x256xf32>
    %8 = tpu.matmul %6, %7, %cst_9 {dimension_numbers = #tpu.dot_dimension_numbers<[1], [0], [0], [1], [0, 0, 1, 1], [], []>} : vector<8x512xbf16>, vector<512x256xbf16>, vector<8x256xf32> -> vector<8x256xf32>
    %c0_10 = arith.constant 0 : index
    %c0_11 = arith.constant 0 : index
    %9 = vector.load %arg7[%c0_10, %c0_11] : memref<1x256xf32, #tpu.memory_space<vmem>>, vector<1x256xf32>
    %10 = vector.broadcast %9 : vector<1x256xf32> to vector<8x256xf32>
    %11 = arith.addf %8, %10 : vector<8x256xf32>
    %cst_12 = arith.constant dense<0.000000e+00> : vector<8x8xf32>
    %12 = tpu.matmul %5, %11, %cst_12 {dimension_numbers = #tpu.dot_dimension_numbers<[1], [1], [0], [0], [0, 0, 1, 0], [], []>} : vector<8x256xf32>, vector<8x256xf32>, vector<8x8xf32> -> vector<8x8xf32>
    %c0_13 = arith.constant 0 : index
    %13 = memref.load %arg0[%c0_13] : memref<1xf32, #tpu.memory_space<smem>>
    %14 = vector.broadcast %13 : f32 to vector<8x8xf32>
    %15 = arith.mulf %12, %14 : vector<8x8xf32>
    %cst_14 = arith.constant dense<0xFF800000> : vector<8xf32>
    %16 = vector.multi_reduction <maximumf>, %15, %cst_14 [1] : vector<8x8xf32> to vector<8xf32>
    %17 = vector.shape_cast %16 : vector<8xf32> to vector<8x1xf32>
    %18 = vector.broadcast %17 : vector<8x1xf32> to vector<8x8xf32>
    %19 = arith.subf %15, %18 : vector<8x8xf32>
    %20 = math.exp %19 : vector<8x8xf32>
    %cst_15 = arith.constant dense<0.000000e+00> : vector<8xf32>
    %21 = vector.multi_reduction <add>, %20, %cst_15 [1] : vector<8x8xf32> to vector<8xf32>
    %22 = vector.shape_cast %21 : vector<8xf32> to vector<8x1xf32>
    %23 = vector.broadcast %22 : vector<8x1xf32> to vector<8x8xf32>
    %24 = arith.divf %20, %23 : vector<8x8xf32>
    %c0_16 = arith.constant 0 : index
    %c0_17 = arith.constant 0 : index
    %25 = vector.load %arg8[%c0_16, %c0_17] : memref<8x8xf32, #tpu.memory_space<vmem>>, vector<8x8xf32>
    %26 = arith.mulf %24, %25 : vector<8x8xf32>
    %c0_18 = arith.constant 0 : index
    %c0_19 = arith.constant 0 : index
    %27 = vector.load %arg3[%c0_18, %c0_19] : memref<8x256xf32, #tpu.memory_space<vmem>>, vector<8x256xf32>
    %cst_20 = arith.constant dense<0.000000e+00> : vector<8x256xf32>
    %28 = tpu.matmul %26, %27, %cst_20 {dimension_numbers = #tpu.dot_dimension_numbers<[1], [0], [0], [1], [0, 0, 1, 1], [], []>} : vector<8x8xf32>, vector<8x256xf32>, vector<8x256xf32> -> vector<8x256xf32>
    %c0_21 = arith.constant 0 : index
    %c0_22 = arith.constant 0 : index
    %29 = vector.load %arg9[%c0_21, %c0_22] : memref<8x256xf32, #tpu.memory_space<vmem>>, vector<8x256xf32>
    tpu.vector_store %arg9[%c0_21, %c0_22], %28 {strides = array<i32>} : memref<8x256xf32, #tpu.memory_space<vmem>>, vector<8x256xf32>,
    return
  }
}

</mosaic_0001>

<llo_original>
// kernel: tpu_custom_call.1
$region0: #{tpu_custom_call.1}
  #allocation0 [shape = 'u32[]', space=smem, size = 0x4, offset = 0x4, fixed_abs, tag = 'smem constant byte address 0x4 - core index']
  #allocation1 [shape = 'u32[144,128]{1,0:T(1,128)}', space=vmem, size = 0x12000, scoped, tag = 'internal scratch']
  #allocation2 [shape = 'f32[1]{0:T(128)S(6)}', space=smem, size = 0x200, scoped, tag = 'scoped memory for tpu_custom_call.1']
  %s0 = inlined_call_operand.<no memory space> [shape: f32[1], index: 0, kind: input, shape index: {}]
  %s1 = inlined_call_operand.hbm [shape: bf16[8,512], index: 1, kind: input, shape index: {}]
  %s2 = inlined_call_operand.hbm [shape: bf16[8,512], index: 2, kind: input, shape index: {}]
  %s3 = inlined_call_operand.hbm [shape: f32[8,256], index: 3, kind: input, shape index: {}]
  %s4 = inlined_call_operand.hbm [shape: bf16[512,256], index: 4, kind: input, shape index: {}]
  %s5 = inlined_call_operand.vmem [shape: f32[1,256], index: 5, kind: input, shape index: {}]
  %s6 = inlined_call_operand.hbm [shape: bf16[512,256], index: 6, kind: input, shape index: {}]
  %s7 = inlined_call_operand.vmem [shape: f32[1,256], index: 7, kind: input, shape index: {}]
  %s8 = inlined_call_operand.vmem [shape: f32[8,8], index: 8, kind: input, shape index: {}]
  %s9 = inlined_call_operand.hbm [shape: f32[8,256], index: 9, kind: output, shape index: {}]
  %s10 = sld [smem:[#allocation0]]
  $region66: #{tpu_custom_call.1} parent=0
    _
  %s12 = ssub.s32 1, %s10
  %s13 = scalar_select 0, %s12, %s10
  %14 = sst [smem:[#allocation2]] %s0
  $region1: #{tpu_custom_call.1} parent=0
    #allocation3 [shape = 'u8[8192]{0}', space=vmem, size = 0x2000, scoped, tag = 'input window, operand 1, single buffered']
    #allocation4 [shape = 's32[1]{0}', space=sflag, size = 0x4, scoped, tag = 'scoped memory for tpu_custom_call.1']
    #allocation5 [shape = 's32[1]{0}', space=sflag, size = 0x4, scoped, tag = 'scoped memory for tpu_custom_call.1']
    #allocation6 [shape = 'u8[8192]{0}', space=vmem, size = 0x2000, scoped, tag = 'input window, operand 2, single buffered']
    #allocation7 [shape = 's32[1]{0}', space=sflag, size = 0x4, scoped, tag = 'scoped memory for tpu_custom_call.1']
    #allocation8 [shape = 'u8[8192]{0}', space=vmem, size = 0x2000, scoped, tag = 'input window, operand 3, single buffered']
    #allocation9 [shape = 'u8[262144]{0}', space=vmem, size = 0x40000, scoped, tag = 'input window, operand 4, single buffered']
    #allocation10 [shape = 's32[1]{0}', space=sflag, size = 0x4, scoped, tag = 'scoped memory for tpu_custom_call.1']
    #allocation11 [shape = 'u8[262144]{0}', space=vmem, size = 0x40000, scoped, tag = 'input window, operand 6, single buffered']
    #allocation12 [shape = 'u8[8192]{0}', space=vmem, size = 0x2000, scoped, tag = 'output window, operand 0, single buffered']
    %15 = vsyncpa [#allocation4], 0
    %16 = vsyncpa [#allocation7], 0
    %17 = vsyncpa [#allocation10], 0
    %18 = vsyncpa [#allocation5], 0
    // Predicated region
    $region2: #{tpu_custom_call.1} parent=1 // pred_check
      _
    $region3: #{tpu_custom_call.1} parent=1 // pred_check_branch
      %20 = sbr.rel (0) target = $region5
    $region4: #{tpu_custom_call.1} parent=1 // pred_region
      _
    $region5: #{tpu_custom_call.1} parent=1 // pred_fallthru
      _
    // Predicated region
    $region6: #{tpu_custom_call.1} parent=1 // pred_check
      _
    $region7: #{tpu_custom_call.1} parent=1 // pred_check_branch
      %22 = sbr.rel (0) target = $region9
    $region8: #{tpu_custom_call.1} parent=1 // pred_region
      %s24 = ssub.s32 256, 256
      %25 = vsyncadd [#allocation4], %s24
      %s27 = sshll.u32 [#allocation3], 4
      %s28 = int_to_ptr.vmem [resolvable:$true] %s27
      %30 = dma.hbm_to_vmem [thread:$0]  %s1, 256, %s28, [#allocation4]
    $region9: #{tpu_custom_call.1} parent=1 // pred_fallthru
      _
    // Predicated region
    $region10: #{tpu_custom_call.1} parent=1 // pred_check
      _
    $region11: #{tpu_custom_call.1} parent=1 // pred_check_branch
      %32 = sbr.rel (0) target = $region13
    $region12: #{tpu_custom_call.1} parent=1 // pred_region
      %s34 = ssub.s32 256, 256
      %35 = vsyncadd [#allocation7], %s34
      %s37 = sshll.u32 [#allocation6], 4
      %s38 = int_to_ptr.vmem [resolvable:$true] %s37
      %40 = dma.hbm_to_vmem [thread:$0]  %s2, 256, %s38, [#allocation7]
    $region13: #{tpu_custom_call.1} parent=1 // pred_fallthru
      _
    // Predicated region
    $region14: #{tpu_custom_call.1} parent=1 // pred_check
      _
    $region15: #{tpu_custom_call.1} parent=1 // pred_check_branch
      %42 = sbr.rel (0) target = $region17
    $region16: #{tpu_custom_call.1} parent=1 // pred_region
      %s44 = ssub.s32 256, 256
      %45 = vsyncadd [#allocation7], %s44
      %s47 = sshll.u32 [#allocation8], 4
      %s48 = int_to_ptr.vmem [resolvable:$true] %s47
      %50 = dma.hbm_to_vmem [thread:$0]  %s3, 256, %s48, [#allocation7]
    $region17: #{tpu_custom_call.1} parent=1 // pred_fallthru
      _
    // Predicated region
    $region18: #{tpu_custom_call.1} parent=1 // pred_check
      _
    $region19: #{tpu_custom_call.1} parent=1 // pred_check_branch
      %52 = sbr.rel (0) target = $region21
    $region20: #{tpu_custom_call.1} parent=1 // pred_region
      %s54 = ssub.s32 8192, 8192
      %55 = vsyncadd [#allocation10], %s54
      %s56 = sshll.u32 [#allocation9], 4
      %s57 = int_to_ptr.vmem [resolvable:$true] %s56
      %62 = dma.hbm_to_vmem [thread:$0]  %s4, 8192, %s57, [#allocation10], 128, 128, 8
    $region21: #{tpu_custom_call.1} parent=1 // pred_fallthru
      _
    // Predicated region
    $region22: #{tpu_custom_call.1} parent=1 // pred_check
      _
    $region23: #{tpu_custom_call.1} parent=1 // pred_check_branch
      %64 = sbr.rel (0) target = $region25
    $region24: #{tpu_custom_call.1} parent=1 // pred_region
      _
    $region25: #{tpu_custom_call.1} parent=1 // pred_fallthru
      _
    // Predicated region
    $region26: #{tpu_custom_call.1} parent=1 // pred_check
      _
    $region27: #{tpu_custom_call.1} parent=1 // pred_check_branch
      %66 = sbr.rel (0) target = $region29
    $region28: #{tpu_custom_call.1} parent=1 // pred_region
      %s68 = ssub.s32 8192, 8192
      %69 = vsyncadd [#allocation10], %s68
      %s70 = sshll.u32 [#allocation11], 4
      %s71 = int_to_ptr.vmem [resolvable:$true] %s70
      %76 = dma.hbm_to_vmem [thread:$0]  %s6, 8192, %s71, [#allocation10], 128, 128, 8
    $region29: #{tpu_custom_call.1} parent=1 // pred_fallthru
      _
    // Predicated region
    $region30: #{tpu_custom_call.1} parent=1 // pred_check
      _
    $region31: #{tpu_custom_call.1} parent=1 // pred_check_branch
      %78 = sbr.rel (0) target = $region33
    $region32: #{tpu_custom_call.1} parent=1 // pred_region
      _
    $region33: #{tpu_custom_call.1} parent=1 // pred_fallthru
      _
    // Predicated region
    $region34: #{tpu_custom_call.1} parent=1 // pred_check
      _
    $region35: #{tpu_custom_call.1} parent=1 // pred_check_branch
      %80 = sbr.rel (0) target = $region37
    $region36: #{tpu_custom_call.1} parent=1 // pred_region
      _
    $region37: #{tpu_custom_call.1} parent=1 // pred_fallthru
      _
    // Predicated region
    $region38: #{tpu_custom_call.1} parent=1 // pred_check
      _
    $region39: #{tpu_custom_call.1} parent=1 // pred_check_branch
      %82 = sbr.rel (0) target = $region41
    $region40: #{tpu_custom_call.1} parent=1 // pred_region
      %83 = dma.done [#allocation4], 256
    $region41: #{tpu_custom_call.1} parent=1 // pred_fallthru
      _
    // Predicated region
    $region42: #{tpu_custom_call.1} parent=1 // pred_check
      _
    $region43: #{tpu_custom_call.1} parent=1 // pred_check_branch
      %85 = sbr.rel (0) target = $region45
    $region44: #{tpu_custom_call.1} parent=1 // pred_region
      %86 = dma.done [#allocation7], 256
    $region45: #{tpu_custom_call.1} parent=1 // pred_fallthru
      _
    // Predicated region
    $region46: #{tpu_custom_call.1} parent=1 // pred_check
      _
    $region47: #{tpu_custom_call.1} parent=1 // pred_check_branch
      %88 = sbr.rel (0) target = $region49
    $region48: #{tpu_custom_call.1} parent=1 // pred_region
      %89 = dma.done [#allocation7], 256
    $region49: #{tpu_custom_call.1} parent=1 // pred_fallthru
      _
    // Predicated region
    $region50: #{tpu_custom_call.1} parent=1 // pred_check
      _
    $region51: #{tpu_custom_call.1} parent=1 // pred_check_branch
      %91 = sbr.rel (0) target = $region53
    $region52: #{tpu_custom_call.1} parent=1 // pred_region
      %92 = dma.done [#allocation10], 8192
    $region53: #{tpu_custom_call.1} parent=1 // pred_fallthru
      _
    // Predicated region
    $region54: #{tpu_custom_call.1} parent=1 // pred_check
      _
    $region55: #{tpu_custom_call.1} parent=1 // pred_check_branch
      %94 = sbr.rel (0) target = $region57
    $region56: #{tpu_custom_call.1} parent=1 // pred_region
      %95 = dma.done [#allocation10], 8192
    $region57: #{tpu_custom_call.1} parent=1 // pred_fallthru
      _
    %v96 = vld [vmem:[#allocation3] sm:$0xff]
    %v97 = vld [vmem:[#allocation3 + $0x8] sm:$0xff]
    %v98 = vld [vmem:[#allocation9] sm:$0xff]
    %v99 = vld [vmem:[#allocation9 + $0x8] sm:$0xff]
    %v100 = vld [vmem:[#allocation9 + $0x10] sm:$0xff]
    %v101 = vld [vmem:[#allocation9 + $0x18] sm:$0xff]
    %v102 = vld [vmem:[#allocation9 + $0x20] sm:$0xff]
    %v103 = vld [vmem:[#allocation9 + $0x28] sm:$0xff]
    %v104 = vld [vmem:[#allocation9 + $0x30] sm:$0xff]
    %v105 = vld [vmem:[#allocation9 + $0x38] sm:$0xff]
    %v106 = vld [vmem:[#allocation9 + $0x40] sm:$0xff]
    %v107 = vld [vmem:[#allocation9 + $0x48] sm:$0xff]
    %v108 = vld [vmem:[#allocation9 + $0x50] sm:$0xff]
    %v109 = vld [vmem:[#allocation9 + $0x58] sm:$0xff]
    %v110 = vld [vmem:[#allocation9 + $0x60] sm:$0xff]
    %v111 = vld [vmem:[#allocation9 + $0x68] sm:$0xff]
    %v112 = vld [vmem:[#allocation9 + $0x70] sm:$0xff]
    %v113 = vld [vmem:[#allocation9 + $0x78] sm:$0xff]
    %v114 = vld [vmem:[#allocation9 + $0x80] sm:$0xff]
    %v115 = vld [vmem:[#allocation9 + $0x88] sm:$0xff]
    %v116 = vld [vmem:[#allocation9 + $0x90] sm:$0xff]
    %v117 = vld [vmem:[#allocation9 + $0x98] sm:$0xff]
    %v118 = vld [vmem:[#allocation9 + $0xa0] sm:$0xff]
    %v119 = vld [vmem:[#allocation9 + $0xa8] sm:$0xff]
    %v120 = vld [vmem:[#allocation9 + $0xb0] sm:$0xff]
    %v121 = vld [vmem:[#allocation9 + $0xb8] sm:$0xff]
    %v122 = vld [vmem:[#allocation9 + $0xc0] sm:$0xff]
    %v123 = vld [vmem:[#allocation9 + $0xc8] sm:$0xff]
    %v124 = vld [vmem:[#allocation9 + $0xd0] sm:$0xff]
    %v125 = vld [vmem:[#allocation9 + $0xd8] sm:$0xff]
    %v126 = vld [vmem:[#allocation9 + $0xe0] sm:$0xff]
    %v127 = vld [vmem:[#allocation9 + $0xe8] sm:$0xff]
    %v128 = vld [vmem:[#allocation9 + $0xf0] sm:$0xff]
    %v129 = vld [vmem:[#allocation9 + $0xf8] sm:$0xff]
    %v130 = vld [vmem:[#allocation9 + $0x100] sm:$0xff]
    %v131 = vld [vmem:[#allocation9 + $0x108] sm:$0xff]
    %v132 = vld [vmem:[#allocation9 + $0x110] sm:$0xff]
    %v133 = vld [vmem:[#allocation9 + $0x118] sm:$0xff]
    %v134 = vld [vmem:[#allocation9 + $0x120] sm:$0xff]
    %v135 = vld [vmem:[#allocation9 + $0x128] sm:$0xff]
    %v136 = vld [vmem:[#allocation9 + $0x130] sm:$0xff]
    %v137 = vld [vmem:[#allocation9 + $0x138] sm:$0xff]
    %v138 = vld [vmem:[#allocation9 + $0x140] sm:$0xff]
    %v139 = vld [vmem:[#allocation9 + $0x148] sm:$0xff]
    %v140 = vld [vmem:[#allocation9 + $0x150] sm:$0xff]
    %v141 = vld [vmem:[#allocation9 + $0x158] sm:$0xff]
    %v142 = vld [vmem:[#allocation9 + $0x160] sm:$0xff]
    %v143 = vld [vmem:[#allocation9 + $0x168] sm:$0xff]
    %v144 = vld [vmem:[#allocation9 + $0x170] sm:$0xff]
    %v145 = vld [vmem:[#allocation9 + $0x178] sm:$0xff]
    %v146 = vld [vmem:[#allocation9 + $0x180] sm:$0xff]
    %v147 = vld [vmem:[#allocation9 + $0x188] sm:$0xff]
    %v148 = vld [vmem:[#allocation9 + $0x190] sm:$0xff]
    %v149 = vld [vmem:[#allocation9 + $0x198] sm:$0xff]
    %v150 = vld [vmem:[#allocation9 + $0x1a0] sm:$0xff]
    %v151 = vld [vmem:[#allocation9 + $0x1a8] sm:$0xff]
    %v152 = vld [vmem:[#allocation9 + $0x1b0] sm:$0xff]
    %v153 = vld [vmem:[#allocation9 + $0x1b8] sm:$0xff]
    %v154 = vld [vmem:[#allocation9 + $0x1c0] sm:$0xff]
    %v155 = vld [vmem:[#allocation9 + $0x1c8] sm:$0xff]
    %v156 = vld [vmem:[#allocation9 + $0x1d0] sm:$0xff]
    %v157 = vld [vmem:[#allocation9 + $0x1d8] sm:$0xff]
    %v158 = vld [vmem:[#allocation9 + $0x1e0] sm:$0xff]
    %v159 = vld [vmem:[#allocation9 + $0x1e8] sm:$0xff]
    %v160 = vld [vmem:[#allocation9 + $0x1f0] sm:$0xff]
    %v161 = vld [vmem:[#allocation9 + $0x1f8] sm:$0xff]
    %v162 = vld [vmem:[%s5] sm:$0x3]
    %v164 = vlaneseq
    %v165 = vshrl.u32 %v164, 7
    %v166 = vsub.s32 0, %v165
    %v167 = vrot.slane %v162, %v166
    %v168 = vlaneseq
    %v169 = vshrl.u32 %v168, 7
    %v170 = vsub.s32 1, %v169
    %v171 = vrot.slane %v162, %v170
    %v176 = vunpack.c.l.b16 %v96
    %v177 = vunpack.c.h.b16 %v96
    %v178 = vunpack.c.l.b16 %v97
    %v179 = vunpack.c.h.b16 %v97
    %v180 = vpack.c.b16 %v176, %v176
    %v181 = vpack.c.b16 %v177, %v177
    %v182 = vpack.c.b16 %v178, %v178
    %v183 = vpack.c.b16 %v179, %v179
    %v252 = vunpack.c.l.b16 %v98
    %v253 = vunpack.c.h.b16 %v98
    %v254 = vunpack.c.l.b16 %v99
    %v255 = vunpack.c.h.b16 %v99
    %v256 = vunpack.c.l.b16 %v100
    %v257 = vunpack.c.h.b16 %v100
    %v258 = vunpack.c.l.b16 %v101
    %v259 = vunpack.c.h.b16 %v101
    %v260 = vunpack.c.l.b16 %v102
    %v261 = vunpack.c.h.b16 %v102
    %v262 = vunpack.c.l.b16 %v103
    %v263 = vunpack.c.h.b16 %v103
    %v264 = vunpack.c.l.b16 %v104
    %v265 = vunpack.c.h.b16 %v104
    %v266 = vunpack.c.l.b16 %v105
    %v267 = vunpack.c.h.b16 %v105
    %v268 = vunpack.c.l.b16 %v106
    %v269 = vunpack.c.h.b16 %v106
    %v270 = vunpack.c.l.b16 %v107
    %v271 = vunpack.c.h.b16 %v107
    %v272 = vunpack.c.l.b16 %v108
    %v273 = vunpack.c.h.b16 %v108
    %v274 = vunpack.c.l.b16 %v109
    %v275 = vunpack.c.h.b16 %v109
    %v276 = vunpack.c.l.b16 %v110
    %v277 = vunpack.c.h.b16 %v110
    %v278 = vunpack.c.l.b16 %v111
    %v279 = vunpack.c.h.b16 %v111
    %v280 = vunpack.c.l.b16 %v112
    %v281 = vunpack.c.h.b16 %v112
    %v282 = vunpack.c.l.b16 %v113
    %v283 = vunpack.c.h.b16 %v113
    %v284 = vunpack.c.l.b16 %v114
    %v285 = vunpack.c.h.b16 %v114
    %v286 = vunpack.c.l.b16 %v115
    %v287 = vunpack.c.h.b16 %v115
    %v288 = vunpack.c.l.b16 %v116
    %v289 = vunpack.c.h.b16 %v116
    %v290 = vunpack.c.l.b16 %v117
    %v291 = vunpack.c.h.b16 %v117
    %v292 = vunpack.c.l.b16 %v118
    %v293 = vunpack.c.h.b16 %v118
    %v294 = vunpack.c.l.b16 %v119
    %v295 = vunpack.c.h.b16 %v119
    %v296 = vunpack.c.l.b16 %v120
    %v297 = vunpack.c.h.b16 %v120
    %v298 = vunpack.c.l.b16 %v121
    %v299 = vunpack.c.h.b16 %v121
    %v300 = vunpack.c.l.b16 %v122
    %v301 = vunpack.c.h.b16 %v122
    %v302 = vunpack.c.l.b16 %v123
    %v303 = vunpack.c.h.b16 %v123
    %v304 = vunpack.c.l.b16 %v124
    %v305 = vunpack.c.h.b16 %v124
    %v306 = vunpack.c.l.b16 %v125
    %v307 = vunpack.c.h.b16 %v125
    %v308 = vunpack.c.l.b16 %v126
    %v309 = vunpack.c.h.b16 %v126
    %v310 = vunpack.c.l.b16 %v127
    %v311 = vunpack.c.h.b16 %v127
    %v312 = vunpack.c.l.b16 %v128
    %v313 = vunpack.c.h.b16 %v128
    %v314 = vunpack.c.l.b16 %v129
    %v315 = vunpack.c.h.b16 %v129
    %v316 = vunpack.c.l.b16 %v130
    %v317 = vunpack.c.h.b16 %v130
    %v318 = vunpack.c.l.b16 %v131
    %v319 = vunpack.c.h.b16 %v131
    %v320 = vunpack.c.l.b16 %v132
    %v321 = vunpack.c.h.b16 %v132
    %v322 = vunpack.c.l.b16 %v133
    %v323 = vunpack.c.h.b16 %v133
    %v324 = vunpack.c.l.b16 %v134
    %v325 = vunpack.c.h.b16 %v134
    %v326 = vunpack.c.l.b16 %v135
    %v327 = vunpack.c.h.b16 %v135
    %v328 = vunpack.c.l.b16 %v136
    %v329 = vunpack.c.h.b16 %v136
    %v330 = vunpack.c.l.b16 %v137
    %v331 = vunpack.c.h.b16 %v137
    %v332 = vunpack.c.l.b16 %v138
    %v333 = vunpack.c.h.b16 %v138
    %v334 = vunpack.c.l.b16 %v139
    %v335 = vunpack.c.h.b16 %v139
    %v336 = vunpack.c.l.b16 %v140
    %v337 = vunpack.c.h.b16 %v140
    %v338 = vunpack.c.l.b16 %v141
    %v339 = vunpack.c.h.b16 %v141
    %v340 = vunpack.c.l.b16 %v142
    %v341 = vunpack.c.h.b16 %v142
    %v342 = vunpack.c.l.b16 %v143
    %v343 = vunpack.c.h.b16 %v143
    %v344 = vunpack.c.l.b16 %v144
    %v345 = vunpack.c.h.b16 %v144
    %v346 = vunpack.c.l.b16 %v145
    %v347 = vunpack.c.h.b16 %v145
    %v348 = vunpack.c.l.b16 %v146
    %v349 = vunpack.c.h.b16 %v146
    %v350 = vunpack.c.l.b16 %v147
    %v351 = vunpack.c.h.b16 %v147
    %v352 = vunpack.c.l.b16 %v148
    %v353 = vunpack.c.h.b16 %v148
    %v354 = vunpack.c.l.b16 %v149
    %v355 = vunpack.c.h.b16 %v149
    %v356 = vunpack.c.l.b16 %v150
    %v357 = vunpack.c.h.b16 %v150
    %v358 = vunpack.c.l.b16 %v151
    %v359 = vunpack.c.h.b16 %v151
    %v360 = vunpack.c.l.b16 %v152
    %v361 = vunpack.c.h.b16 %v152
    %v362 = vunpack.c.l.b16 %v153
    %v363 = vunpack.c.h.b16 %v153
    %v364 = vunpack.c.l.b16 %v154
    %v365 = vunpack.c.h.b16 %v154
    %v366 = vunpack.c.l.b16 %v155
    %v367 = vunpack.c.h.b16 %v155
    %v368 = vunpack.c.l.b16 %v156
    %v369 = vunpack.c.h.b16 %v156
    %v370 = vunpack.c.l.b16 %v157
    %v371 = vunpack.c.h.b16 %v157
    %v372 = vunpack.c.l.b16 %v158
    %v373 = vunpack.c.h.b16 %v158
    %v374 = vunpack.c.l.b16 %v159
    %v375 = vunpack.c.h.b16 %v159
    %v376 = vunpack.c.l.b16 %v160
    %v377 = vunpack.c.h.b16 %v160
    %v378 = vunpack.c.l.b16 %v161
    %v379 = vunpack.c.h.b16 %v161
    %v380 = vpack.c.b16 %v254, %v252
    %v381 = vpack.c.b16 %v255, %v253
    %v382 = vpack.c.b16 %v258, %v256
    %v383 = vpack.c.b16 %v259, %v257
    %v384 = vpack.c.b16 %v262, %v260
    %v385 = vpack.c.b16 %v263, %v261
    %v386 = vpack.c.b16 %v266, %v264
    %v387 = vpack.c.b16 %v267, %v265
    %v388 = vpack.c.b16 %v270, %v268
    %v389 = vpack.c.b16 %v271, %v269
    %v390 = vpack.c.b16 %v274, %v272
    %v391 = vpack.c.b16 %v275, %v273
    %v392 = vpack.c.b16 %v278, %v276
    %v393 = vpack.c.b16 %v279, %v277
    %v394 = vpack.c.b16 %v282, %v280
    %v395 = vpack.c.b16 %v283, %v281
    %v396 = vpack.c.b16 %v286, %v284
    %v397 = vpack.c.b16 %v287, %v285
    %v398 = vpack.c.b16 %v290, %v288
    %v399 = vpack.c.b16 %v291, %v289
    %v400 = vpack.c.b16 %v294, %v292
    %v401 = vpack.c.b16 %v295, %v293
    %v402 = vpack.c.b16 %v298, %v296
    %v403 = vpack.c.b16 %v299, %v297
    %v404 = vpack.c.b16 %v302, %v300
    %v405 = vpack.c.b16 %v303, %v301
    %v406 = vpack.c.b16 %v306, %v304
    %v407 = vpack.c.b16 %v307, %v305
    %v408 = vpack.c.b16 %v310, %v308
    %v409 = vpack.c.b16 %v311, %v309
    %v410 = vpack.c.b16 %v314, %v312
    %v411 = vpack.c.b16 %v315, %v313
    %v412 = vpack.c.b16 %v318, %v316
    %v413 = vpack.c.b16 %v319, %v317
    %v414 = vpack.c.b16 %v322, %v320
    %v415 = vpack.c.b16 %v323, %v321
    %v416 = vpack.c.b16 %v326, %v324
    %v417 = vpack.c.b16 %v327, %v325
    %v418 = vpack.c.b16 %v330, %v328
    %v419 = vpack.c.b16 %v331, %v329
    %v420 = vpack.c.b16 %v334, %v332
    %v421 = vpack.c.b16 %v335, %v333
    %v422 = vpack.c.b16 %v338, %v336
    %v423 = vpack.c.b16 %v339, %v337
    %v424 = vpack.c.b16 %v342, %v340
    %v425 = vpack.c.b16 %v343, %v341
    %v426 = vpack.c.b16 %v346, %v344
    %v427 = vpack.c.b16 %v347, %v345
    %v428 = vpack.c.b16 %v350, %v348
    %v429 = vpack.c.b16 %v351, %v349
    %v430 = vpack.c.b16 %v354, %v352
    %v431 = vpack.c.b16 %v355, %v353
    %v432 = vpack.c.b16 %v358, %v356
    %v433 = vpack.c.b16 %v359, %v357
    %v434 = vpack.c.b16 %v362, %v360
    %v435 = vpack.c.b16 %v363, %v361
    %v436 = vpack.c.b16 %v366, %v364
    %v437 = vpack.c.b16 %v367, %v365
    %v438 = vpack.c.b16 %v370, %v368
    %v439 = vpack.c.b16 %v371, %v369
    %v440 = vpack.c.b16 %v374, %v372
    %v441 = vpack.c.b16 %v375, %v373
    %v442 = vpack.c.b16 %v378, %v376
    %v443 = vpack.c.b16 %v379, %v377
    %508 = vmatprep.subr.bf16.mxu0 %v381
    %509 = vmatpush1.bf16.msra.mxu0 %v380
    %510 = vmatprep.subr.bf16.mxu0 %v383
    %511 = vmatpush1.bf16.msra.mxu0 %v382
    %512 = vmatprep.subr.bf16.mxu0 %v385
    %513 = vmatpush1.bf16.msra.mxu0 %v384
    %514 = vmatprep.subr.bf16.mxu0 %v387
    %515 = vmatpush1.bf16.msra.mxu0 %v386
    %516 = vmatprep.subr.bf16.mxu0 %v389
    %517 = vmatpush1.bf16.msra.mxu0 %v388
    %518 = vmatprep.subr.bf16.mxu0 %v391
    %519 = vmatpush1.bf16.msra.mxu0 %v390
    %520 = vmatprep.subr.bf16.mxu0 %v393
    %521 = vmatpush1.bf16.msra.mxu0 %v392
    %522 = vmatprep.subr.bf16.mxu0 %v395
    %523 = vmatpush1.bf16.msra.mxu0 %v394
    %524 = vmatprep.subr.bf16.mxu0 %v397
    %525 = vmatpush1.bf16.msra.mxu0 %v396
    %526 = vmatprep.subr.bf16.mxu0 %v399
    %527 = vmatpush1.bf16.msra.mxu0 %v398
    %528 = vmatprep.subr.bf16.mxu0 %v401
    %529 = vmatpush1.bf16.msra.mxu0 %v400
    %530 = vmatprep.subr.bf16.mxu0 %v403
    %531 = vmatpush1.bf16.msra.mxu0 %v402
    %532 = vmatprep.subr.bf16.mxu0 %v405
    %533 = vmatpush1.bf16.msra.mxu0 %v404
    %534 = vmatprep.subr.bf16.mxu0 %v407
    %535 = vmatpush1.bf16.msra.mxu0 %v406
    %536 = vmatprep.subr.bf16.mxu0 %v409
    %537 = vmatpush1.bf16.msra.mxu0 %v408
    %538 = vmatprep.subr.bf16.mxu0 %v411
    %539 = vmatpush1.bf16.msra.mxu0 %v410
    %540 = vmatprep.mubr.bf16.mxu0 %v181
    %541 = vmatmul.mubr.bf16.gmra.mrb[0].mxu0 %v180
    %v542 = vpop.f32.mrb[0].mxu0
    %v543 = vadd.f32 %v167, %v542
    %v544 = vpop.f32.mrb[0].mxu0
    %v545 = vadd.f32 %v171, %v544
    %v546 = vpop.f32.mrb[0].mxu0
    %v547 = vpop.f32.mrb[0].mxu0
    %548 = vdwg.mxu0
    %549 = vmatprep.subr.bf16.mxu0 %v413
    %550 = vmatpush1.bf16.msra.mxu0 %v412
    %551 = vmatprep.subr.bf16.mxu0 %v415
    %552 = vmatpush1.bf16.msra.mxu0 %v414
    %553 = vmatprep.subr.bf16.mxu0 %v417
    %554 = vmatpush1.bf16.msra.mxu0 %v416
    %555 = vmatprep.subr.bf16.mxu0 %v419
    %556 = vmatpush1.bf16.msra.mxu0 %v418
    %557 = vmatprep.subr.bf16.mxu0 %v421
    %558 = vmatpush1.bf16.msra.mxu0 %v420
    %559 = vmatprep.subr.bf16.mxu0 %v423
    %560 = vmatpush1.bf16.msra.mxu0 %v422
    %561 = vmatprep.subr.bf16.mxu0 %v425
    %562 = vmatpush1.bf16.msra.mxu0 %v424
    %563 = vmatprep.subr.bf16.mxu0 %v427
    %564 = vmatpush1.bf16.msra.mxu0 %v426
    %565 = vmatprep.subr.bf16.mxu0 %v429
    %566 = vmatpush1.bf16.msra.mxu0 %v428
    %567 = vmatprep.subr.bf16.mxu0 %v431
    %568 = vmatpush1.bf16.msra.mxu0 %v430
    %569 = vmatprep.subr.bf16.mxu0 %v433
    %570 = vmatpush1.bf16.msra.mxu0 %v432
    %571 = vmatprep.subr.bf16.mxu0 %v435
    %572 = vmatpush1.bf16.msra.mxu0 %v434
    %573 = vmatprep.subr.bf16.mxu0 %v437
    %574 = vmatpush1.bf16.msra.mxu0 %v436
    %575 = vmatprep.subr.bf16.mxu0 %v439
    %576 = vmatpush1.bf16.msra.mxu0 %v438
    %577 = vmatprep.subr.bf16.mxu0 %v441
    %578 = vmatpush1.bf16.msra.mxu0 %v440
    %579 = vmatprep.subr.bf16.mxu0 %v443
    %580 = vmatpush1.bf16.msra.mxu0 %v442
    %581 = vmatprep.mubr.bf16.mxu0 %v183
    %582 = vmatmul.mubr.bf16.gmra.mrb[0].mxu0 %v182
    %v583 = vpop.f32.mrb[0].mxu0
    %v584 = vadd.f32 %v543, %v583
    %v585 = vpop.f32.mrb[0].mxu0
    %v586 = vadd.f32 %v545, %v585
    %v587 = vpop.f32.mrb[0].mxu0
    %v588 = vpop.f32.mrb[0].mxu0
    %589 = vdwg.mxu0
    %v590 = vld [vmem:[#allocation6] sm:$0xff]
    %v591 = vld [vmem:[#allocation6 + $0x8] sm:$0xff]
    %v592 = vld [vmem:[#allocation11] sm:$0xff]
    %v593 = vld [vmem:[#allocation11 + $0x8] sm:$0xff]
    %v594 = vld [vmem:[#allocation11 + $0x10] sm:$0xff]
    %v595 = vld [vmem:[#allocation11 + $0x18] sm:$0xff]
    %v596 = vld [vmem:[#allocation11 + $0x20] sm:$0xff]
    %v597 = vld [vmem:[#allocation11 + $0x28] sm:$0xff]
    %v598 = vld [vmem:[#allocation11 + $0x30] sm:$0xff]
    %v599 = vld [vmem:[#allocation11 + $0x38] sm:$0xff]
    %v600 = vld [vmem:[#allocation11 + $0x40] sm:$0xff]
    %v601 = vld [vmem:[#allocation11 + $0x48] sm:$0xff]
    %v602 = vld [vmem:[#allocation11 + $0x50] sm:$0xff]
    %v603 = vld [vmem:[#allocation11 + $0x58] sm:$0xff]
    %v604 = vld [vmem:[#allocation11 + $0x60] sm:$0xff]
    %v605 = vld [vmem:[#allocation11 + $0x68] sm:$0xff]
    %v606 = vld [vmem:[#allocation11 + $0x70] sm:$0xff]
    %v607 = vld [vmem:[#allocation11 + $0x78] sm:$0xff]
    %v608 = vld [vmem:[#allocation11 + $0x80] sm:$0xff]
    %v609 = vld [vmem:[#allocation11 + $0x88] sm:$0xff]
    %v610 = vld [vmem:[#allocation11 + $0x90] sm:$0xff]
    %v611 = vld [vmem:[#allocation11 + $0x98] sm:$0xff]
    %v612 = vld [vmem:[#allocation11 + $0xa0] sm:$0xff]
    %v613 = vld [vmem:[#allocation11 + $0xa8] sm:$0xff]
    %v614 = vld [vmem:[#allocation11 + $0xb0] sm:$0xff]
    %v615 = vld [vmem:[#allocation11 + $0xb8] sm:$0xff]
    %v616 = vld [vmem:[#allocation11 + $0xc0] sm:$0xff]
    %v617 = vld [vmem:[#allocation11 + $0xc8] sm:$0xff]
    %v618 = vld [vmem:[#allocation11 + $0xd0] sm:$0xff]
    %v619 = vld [vmem:[#allocation11 + $0xd8] sm:$0xff]
    %v620 = vld [vmem:[#allocation11 + $0xe0] sm:$0xff]
    %v621 = vld [vmem:[#allocation11 + $0xe8] sm:$0xff]
    %v622 = vld [vmem:[#allocation11 + $0xf0] sm:$0xff]
    %v623 = vld [vmem:[#allocation11 + $0xf8] sm:$0xff]
    %v624 = vld [vmem:[#allocation11 + $0x100] sm:$0xff]
    %v625 = vld [vmem:[#allocation11 + $0x108] sm:$0xff]
    %v626 = vld [vmem:[#allocation11 + $0x110] sm:$0xff]
    %v627 = vld [vmem:[#allocation11 + $0x118] sm:$0xff]
    %v628 = vld [vmem:[#allocation11 + $0x120] sm:$0xff]
    %v629 = vld [vmem:[#allocation11 + $0x128] sm:$0xff]
    %v630 = vld [vmem:[#allocation11 + $0x130] sm:$0xff]
    %v631 = vld [vmem:[#allocation11 + $0x138] sm:$0xff]
    %v632 = vld [vmem:[#allocation11 + $0x140] sm:$0xff]
    %v633 = vld [vmem:[#allocation11 + $0x148] sm:$0xff]
    %v634 = vld [vmem:[#allocation11 + $0x150] sm:$0xff]
    %v635 = vld [vmem:[#allocation11 + $0x158] sm:$0xff]
    %v636 = vld [vmem:[#allocation11 + $0x160] sm:$0xff]
    %v637 = vld [vmem:[#allocation11 + $0x168] sm:$0xff]
    %v638 = vld [vmem:[#allocation11 + $0x170] sm:$0xff]
    %v639 = vld [vmem:[#allocation11 + $0x178] sm:$0xff]
    %v640 = vld [vmem:[#allocation11 + $0x180] sm:$0xff]
    %v641 = vld [vmem:[#allocation11 + $0x188] sm:$0xff]
    %v642 = vld [vmem:[#allocation11 + $0x190] sm:$0xff]
    %v643 = vld [vmem:[#allocation11 + $0x198] sm:$0xff]
    %v644 = vld [vmem:[#allocation11 + $0x1a0] sm:$0xff]
    %v645 = vld [vmem:[#allocation11 + $0x1a8] sm:$0xff]
    %v646 = vld [vmem:[#allocation11 + $0x1b0] sm:$0xff]
    %v647 = vld [vmem:[#allocation11 + $0x1b8] sm:$0xff]
    %v648 = vld [vmem:[#allocation11 + $0x1c0] sm:$0xff]
    %v649 = vld [vmem:[#allocation11 + $0x1c8] sm:$0xff]
    %v650 = vld [vmem:[#allocation11 + $0x1d0] sm:$0xff]
    %v651 = vld [vmem:[#allocation11 + $0x1d8] sm:$0xff]
    %v652 = vld [vmem:[#allocation11 + $0x1e0] sm:$0xff]
    %v653 = vld [vmem:[#allocation11 + $0x1e8] sm:$0xff]
    %v654 = vld [vmem:[#allocation11 + $0x1f0] sm:$0xff]
    %v655 = vld [vmem:[#allocation11 + $0x1f8] sm:$0xff]
    %v656 = vld [vmem:[%s7] sm:$0x3]
    %v658 = vlaneseq
    %v659 = vshrl.u32 %v658, 7
    %v660 = vsub.s32 0, %v659
    %v661 = vrot.slane %v656, %v660
    %v662 = vlaneseq
    %v663 = vshrl.u32 %v662, 7
    %v664 = vsub.s32 1, %v663
    %v665 = vrot.slane %v656, %v664
    %v670 = vunpack.c.l.b16 %v590
    %v671 = vunpack.c.h.b16 %v590
    %v672 = vunpack.c.l.b16 %v591
    %v673 = vunpack.c.h.b16 %v591
    %v674 = vpack.c.b16 %v670, %v670
    %v675 = vpack.c.b16 %v671, %v671
    %v676 = vpack.c.b16 %v672, %v672
    %v677 = vpack.c.b16 %v673, %v673
    %v746 = vunpack.c.l.b16 %v592
    %v747 = vunpack.c.h.b16 %v592
    %v748 = vunpack.c.l.b16 %v593
    %v749 = vunpack.c.h.b16 %v593
    %v750 = vunpack.c.l.b16 %v594
    %v751 = vunpack.c.h.b16 %v594
    %v752 = vunpack.c.l.b16 %v595
    %v753 = vunpack.c.h.b16 %v595
    %v754 = vunpack.c.l.b16 %v596
    %v755 = vunpack.c.h.b16 %v596
    %v756 = vunpack.c.l.b16 %v597
    %v757 = vunpack.c.h.b16 %v597
    %v758 = vunpack.c.l.b16 %v598
    %v759 = vunpack.c.h.b16 %v598
    %v760 = vunpack.c.l.b16 %v599
    %v761 = vunpack.c.h.b16 %v599
    %v762 = vunpack.c.l.b16 %v600
    %v763 = vunpack.c.h.b16 %v600
    %v764 = vunpack.c.l.b16 %v601
    %v765 = vunpack.c.h.b16 %v601
    %v766 = vunpack.c.l.b16 %v602
    %v767 = vunpack.c.h.b16 %v602
    %v768 = vunpack.c.l.b16 %v603
    %v769 = vunpack.c.h.b16 %v603
    %v770 = vunpack.c.l.b16 %v604
    %v771 = vunpack.c.h.b16 %v604
    %v772 = vunpack.c.l.b16 %v605
    %v773 = vunpack.c.h.b16 %v605
    %v774 = vunpack.c.l.b16 %v606
    %v775 = vunpack.c.h.b16 %v606
    %v776 = vunpack.c.l.b16 %v607
    %v777 = vunpack.c.h.b16 %v607
    %v778 = vunpack.c.l.b16 %v608
    %v779 = vunpack.c.h.b16 %v608
    %v780 = vunpack.c.l.b16 %v609
    %v781 = vunpack.c.h.b16 %v609
    %v782 = vunpack.c.l.b16 %v610
    %v783 = vunpack.c.h.b16 %v610
    %v784 = vunpack.c.l.b16 %v611
    %v785 = vunpack.c.h.b16 %v611
    %v786 = vunpack.c.l.b16 %v612
    %v787 = vunpack.c.h.b16 %v612
    %v788 = vunpack.c.l.b16 %v613
    %v789 = vunpack.c.h.b16 %v613
    %v790 = vunpack.c.l.b16 %v614
    %v791 = vunpack.c.h.b16 %v614
    %v792 = vunpack.c.l.b16 %v615
    %v793 = vunpack.c.h.b16 %v615
    %v794 = vunpack.c.l.b16 %v616
    %v795 = vunpack.c.h.b16 %v616
    %v796 = vunpack.c.l.b16 %v617
    %v797 = vunpack.c.h.b16 %v617
    %v798 = vunpack.c.l.b16 %v618
    %v799 = vunpack.c.h.b16 %v618
    %v800 = vunpack.c.l.b16 %v619
    %v801 = vunpack.c.h.b16 %v619
    %v802 = vunpack.c.l.b16 %v620
    %v803 = vunpack.c.h.b16 %v620
    %v804 = vunpack.c.l.b16 %v621
    %v805 = vunpack.c.h.b16 %v621
    %v806 = vunpack.c.l.b16 %v622
    %v807 = vunpack.c.h.b16 %v622
    %v808 = vunpack.c.l.b16 %v623
    %v809 = vunpack.c.h.b16 %v623
    %v810 = vunpack.c.l.b16 %v624
    %v811 = vunpack.c.h.b16 %v624
    %v812 = vunpack.c.l.b16 %v625
    %v813 = vunpack.c.h.b16 %v625
    %v814 = vunpack.c.l.b16 %v626
    %v815 = vunpack.c.h.b16 %v626
    %v816 = vunpack.c.l.b16 %v627
    %v817 = vunpack.c.h.b16 %v627
    %v818 = vunpack.c.l.b16 %v628
    %v819 = vunpack.c.h.b16 %v628
    %v820 = vunpack.c.l.b16 %v629
    %v821 = vunpack.c.h.b16 %v629
    %v822 = vunpack.c.l.b16 %v630
    %v823 = vunpack.c.h.b16 %v630
    %v824 = vunpack.c.l.b16 %v631
    %v825 = vunpack.c.h.b16 %v631
    %v826 = vunpack.c.l.b16 %v632
    %v827 = vunpack.c.h.b16 %v632
    %v828 = vunpack.c.l.b16 %v633
    %v829 = vunpack.c.h.b16 %v633
    %v830 = vunpack.c.l.b16 %v634
    %v831 = vunpack.c.h.b16 %v634
    %v832 = vunpack.c.l.b16 %v635
    %v833 = vunpack.c.h.b16 %v635
    %v834 = vunpack.c.l.b16 %v636
    %v835 = vunpack.c.h.b16 %v636
    %v836 = vunpack.c.l.b16 %v637
    %v837 = vunpack.c.h.b16 %v637
    %v838 = vunpack.c.l.b16 %v638
    %v839 = vunpack.c.h.b16 %v638
    %v840 = vunpack.c.l.b16 %v639
    %v841 = vunpack.c.h.b16 %v639
    %v842 = vunpack.c.l.b16 %v640
    %v843 = vunpack.c.h.b16 %v640
    %v844 = vunpack.c.l.b16 %v641
    %v845 = vunpack.c.h.b16 %v641
    %v846 = vunpack.c.l.b16 %v642
    %v847 = vunpack.c.h.b16 %v642
    %v848 = vunpack.c.l.b16 %v643
    %v849 = vunpack.c.h.b16 %v643
    %v850 = vunpack.c.l.b16 %v644
    %v851 = vunpack.c.h.b16 %v644
    %v852 = vunpack.c.l.b16 %v645
    %v853 = vunpack.c.h.b16 %v645
    %v854 = vunpack.c.l.b16 %v646
    %v855 = vunpack.c.h.b16 %v646
    %v856 = vunpack.c.l.b16 %v647
    %v857 = vunpack.c.h.b16 %v647
    %v858 = vunpack.c.l.b16 %v648
    %v859 = vunpack.c.h.b16 %v648
    %v860 = vunpack.c.l.b16 %v649
    %v861 = vunpack.c.h.b16 %v649
    %v862 = vunpack.c.l.b16 %v650
    %v863 = vunpack.c.h.b16 %v650
    %v864 = vunpack.c.l.b16 %v651
    %v865 = vunpack.c.h.b16 %v651
    %v866 = vunpack.c.l.b16 %v652
    %v867 = vunpack.c.h.b16 %v652
    %v868 = vunpack.c.l.b16 %v653
    %v869 = vunpack.c.h.b16 %v653
    %v870 = vunpack.c.l.b16 %v654
    %v871 = vunpack.c.h.b16 %v654
    %v872 = vunpack.c.l.b16 %v655
    %v873 = vunpack.c.h.b16 %v655
    %v874 = vpack.c.b16 %v748, %v746
    %v875 = vpack.c.b16 %v749, %v747
    %v876 = vpack.c.b16 %v752, %v750
    %v877 = vpack.c.b16 %v753, %v751
    %v878 = vpack.c.b16 %v756, %v754
    %v879 = vpack.c.b16 %v757, %v755
    %v880 = vpack.c.b16 %v760, %v758
    %v881 = vpack.c.b16 %v761, %v759
    %v882 = vpack.c.b16 %v764, %v762
    %v883 = vpack.c.b16 %v765, %v763
    %v884 = vpack.c.b16 %v768, %v766
    %v885 = vpack.c.b16 %v769, %v767
    %v886 = vpack.c.b16 %v772, %v770
    %v887 = vpack.c.b16 %v773, %v771
    %v888 = vpack.c.b16 %v776, %v774
    %v889 = vpack.c.b16 %v777, %v775
    %v890 = vpack.c.b16 %v780, %v778
    %v891 = vpack.c.b16 %v781, %v779
    %v892 = vpack.c.b16 %v784, %v782
    %v893 = vpack.c.b16 %v785, %v783
    %v894 = vpack.c.b16 %v788, %v786
    %v895 = vpack.c.b16 %v789, %v787
    %v896 = vpack.c.b16 %v792, %v790
    %v897 = vpack.c.b16 %v793, %v791
    %v898 = vpack.c.b16 %v796, %v794
    %v899 = vpack.c.b16 %v797, %v795
    %v900 = vpack.c.b16 %v800, %v798
    %v901 = vpack.c.b16 %v801, %v799
    %v902 = vpack.c.b16 %v804, %v802
    %v903 = vpack.c.b16 %v805, %v803
    %v904 = vpack.c.b16 %v808, %v806
    %v905 = vpack.c.b16 %v809, %v807
    %v906 = vpack.c.b16 %v812, %v810
    %v907 = vpack.c.b16 %v813, %v811
    %v908 = vpack.c.b16 %v816, %v814
    %v909 = vpack.c.b16 %v817, %v815
    %v910 = vpack.c.b16 %v820, %v818
    %v911 = vpack.c.b16 %v821, %v819
    %v912 = vpack.c.b16 %v824, %v822
    %v913 = vpack.c.b16 %v825, %v823
    %v914 = vpack.c.b16 %v828, %v826
    %v915 = vpack.c.b16 %v829, %v827
    %v916 = vpack.c.b16 %v832, %v830
    %v917 = vpack.c.b16 %v833, %v831
    %v918 = vpack.c.b16 %v836, %v834
    %v919 = vpack.c.b16 %v837, %v835
    %v920 = vpack.c.b16 %v840, %v838
    %v921 = vpack.c.b16 %v841, %v839
    %v922 = vpack.c.b16 %v844, %v842
    %v923 = vpack.c.b16 %v845, %v843
    %v924 = vpack.c.b16 %v848, %v846
    %v925 = vpack.c.b16 %v849, %v847
    %v926 = vpack.c.b16 %v852, %v850
    %v927 = vpack.c.b16 %v853, %v851
    %v928 = vpack.c.b16 %v856, %v854
    %v929 = vpack.c.b16 %v857, %v855
    %v930 = vpack.c.b16 %v860, %v858
    %v931 = vpack.c.b16 %v861, %v859
    %v932 = vpack.c.b16 %v864, %v862
    %v933 = vpack.c.b16 %v865, %v863
    %v934 = vpack.c.b16 %v868, %v866
    %v935 = vpack.c.b16 %v869, %v867
    %v936 = vpack.c.b16 %v872, %v870
    %v937 = vpack.c.b16 %v873, %v871
    %1002 = vmatprep.subr.bf16.mxu0 %v875
    %1003 = vmatpush1.bf16.msra.mxu0 %v874
    %1004 = vmatprep.subr.bf16.mxu0 %v877
    %1005 = vmatpush1.bf16.msra.mxu0 %v876
    %1006 = vmatprep.subr.bf16.mxu0 %v879
    %1007 = vmatpush1.bf16.msra.mxu0 %v878
    %1008 = vmatprep.subr.bf16.mxu0 %v881
    %1009 = vmatpush1.bf16.msra.mxu0 %v880
    %1010 = vmatprep.subr.bf16.mxu0 %v883
    %1011 = vmatpush1.bf16.msra.mxu0 %v882
    %1012 = vmatprep.subr.bf16.mxu0 %v885
    %1013 = vmatpush1.bf16.msra.mxu0 %v884
    %1014 = vmatprep.subr.bf16.mxu0 %v887
    %1015 = vmatpush1.bf16.msra.mxu0 %v886
    %1016 = vmatprep.subr.bf16.mxu0 %v889
    %1017 = vmatpush1.bf16.msra.mxu0 %v888
    %1018 = vmatprep.subr.bf16.mxu0 %v891
    %1019 = vmatpush1.bf16.msra.mxu0 %v890
    %1020 = vmatprep.subr.bf16.mxu0 %v893
    %1021 = vmatpush1.bf16.msra.mxu0 %v892
    %1022 = vmatprep.subr.bf16.mxu0 %v895
    %1023 = vmatpush1.bf16.msra.mxu0 %v894
    %1024 = vmatprep.subr.bf16.mxu0 %v897
    %1025 = vmatpush1.bf16.msra.mxu0 %v896
    %1026 = vmatprep.subr.bf16.mxu0 %v899
    %1027 = vmatpush1.bf16.msra.mxu0 %v898
    %1028 = vmatprep.subr.bf16.mxu0 %v901
    %1029 = vmatpush1.bf16.msra.mxu0 %v900
    %1030 = vmatprep.subr.bf16.mxu0 %v903
    %1031 = vmatpush1.bf16.msra.mxu0 %v902
    %1032 = vmatprep.subr.bf16.mxu0 %v905
    %1033 = vmatpush1.bf16.msra.mxu0 %v904
    %1034 = vmatprep.mubr.bf16.mxu0 %v675
    %1035 = vmatmul.mubr.bf16.gmra.mrb[0].mxu0 %v674
    %v1036 = vpop.f32.mrb[0].mxu0
    %v1037 = vadd.f32 %v661, %v1036
    %v1038 = vpop.f32.mrb[0].mxu0
    %v1039 = vadd.f32 %v665, %v1038
    %v1040 = vpop.f32.mrb[0].mxu0
    %v1041 = vpop.f32.mrb[0].mxu0
    %1042 = vdwg.mxu0
    %1043 = vmatprep.subr.bf16.mxu0 %v907
    %1044 = vmatpush1.bf16.msra.mxu0 %v906
    %1045 = vmatprep.subr.bf16.mxu0 %v909
    %1046 = vmatpush1.bf16.msra.mxu0 %v908
    %1047 = vmatprep.subr.bf16.mxu0 %v911
    %1048 = vmatpush1.bf16.msra.mxu0 %v910
    %1049 = vmatprep.subr.bf16.mxu0 %v913
    %1050 = vmatpush1.bf16.msra.mxu0 %v912
    %1051 = vmatprep.subr.bf16.mxu0 %v915
    %1052 = vmatpush1.bf16.msra.mxu0 %v914
    %1053 = vmatprep.subr.bf16.mxu0 %v917
    %1054 = vmatpush1.bf16.msra.mxu0 %v916
    %1055 = vmatprep.subr.bf16.mxu0 %v919
    %1056 = vmatpush1.bf16.msra.mxu0 %v918
    %1057 = vmatprep.subr.bf16.mxu0 %v921
    %1058 = vmatpush1.bf16.msra.mxu0 %v920
    %1059 = vmatprep.subr.bf16.mxu0 %v923
    %1060 = vmatpush1.bf16.msra.mxu0 %v922
    %1061 = vmatprep.subr.bf16.mxu0 %v925
    %1062 = vmatpush1.bf16.msra.mxu0 %v924
    %1063 = vmatprep.subr.bf16.mxu0 %v927
    %1064 = vmatpush1.bf16.msra.mxu0 %v926
    %1065 = vmatprep.subr.bf16.mxu0 %v929
    %1066 = vmatpush1.bf16.msra.mxu0 %v928
    %1067 = vmatprep.subr.bf16.mxu0 %v931
    %1068 = vmatpush1.bf16.msra.mxu0 %v930
    %1069 = vmatprep.subr.bf16.mxu0 %v933
    %1070 = vmatpush1.bf16.msra.mxu0 %v932
    %1071 = vmatprep.subr.bf16.mxu0 %v935
    %1072 = vmatpush1.bf16.msra.mxu0 %v934
    %1073 = vmatprep.subr.bf16.mxu0 %v937
    %1074 = vmatpush1.bf16.msra.mxu0 %v936
    %1075 = vmatprep.mubr.bf16.mxu0 %v677
    %1076 = vmatmul.mubr.bf16.gmra.mrb[0].mxu0 %v676
    %v1077 = vpop.f32.mrb[0].mxu0
    %v1078 = vadd.f32 %v1037, %v1077
    %v1079 = vpop.f32.mrb[0].mxu0
    %v1080 = vadd.f32 %v1039, %v1079
    %v1081 = vpop.f32.mrb[0].mxu0
    %v1082 = vpop.f32.mrb[0].mxu0
    %1083 = vdwg.mxu0
    %1084 = vmatprep.subr.mxu0 %v1080
    %1085 = vmatpush1.xpose.msra.mxu0 %v1078
    %1086 = vmatprep.subr.mxu0 0.0
    %1087 = vmatpush1.xpose.msra.mxu0 0.0
    %1088 = vmatprep.subr.mxu0 0.0
    %1089 = vmatpush1.xpose.msra.mxu0 0.0
    %1090 = vmatprep.subr.mxu0 0.0
    %1091 = vmatpush1.xpose.msra.mxu0 0.0
    %1092 = vmatprep.subr.mxu0 0.0
    %1093 = vmatpush1.xpose.msra.mxu0 0.0
    %1094 = vmatprep.subr.mxu0 0.0
    %1095 = vmatpush1.xpose.msra.mxu0 0.0
    %1096 = vmatprep.subr.mxu0 0.0
    %1097 = vmatpush1.xpose.msra.mxu0 0.0
    %1098 = vmatprep.subr.mxu0 0.0
    %1099 = vmatpush1.xpose.msra.mxu0 0.0
    %1100 = vmatprep.subr.mxu0 0.0
    %1101 = vmatpush1.xpose.msra.mxu0 0.0
    %1102 = vmatprep.subr.mxu0 0.0
    %1103 = vmatpush1.xpose.msra.mxu0 0.0
    %1104 = vmatprep.subr.mxu0 0.0
    %1105 = vmatpush1.xpose.msra.mxu0 0.0
    %1106 = vmatprep.subr.mxu0 0.0
    %1107 = vmatpush1.xpose.msra.mxu0 0.0
    %1108 = vmatprep.subr.mxu0 0.0
    %1109 = vmatpush1.xpose.msra.mxu0 0.0
    %1110 = vmatprep.subr.mxu0 0.0
    %1111 = vmatpush1.xpose.msra.mxu0 0.0
    %1112 = vmatprep.subr.mxu0 0.0
    %1113 = vmatpush1.xpose.msra.mxu0 0.0
    %1114 = vmatprep.subr.mxu0 0.0
    %1115 = vmatpush1.xpose.msra.mxu0 0.0
    %1116 = vmatprep.subr.mxu0 0.0
    %1117 = vmatpush1.xpose.msra.mxu0 0.0
    %1118 = vmatprep.subr.mxu0 0.0
    %1119 = vmatpush1.xpose.msra.mxu0 0.0
    %1120 = vmatprep.subr.mxu0 0.0
    %1121 = vmatpush1.xpose.msra.mxu0 0.0
    %1122 = vmatprep.subr.mxu0 0.0
    %1123 = vmatpush1.xpose.msra.mxu0 0.0
    %1124 = vmatprep.subr.mxu0 0.0
    %1125 = vmatpush1.xpose.msra.mxu0 0.0
    %1126 = vmatprep.subr.mxu0 0.0
    %1127 = vmatpush1.xpose.msra.mxu0 0.0
    %1128 = vmatprep.subr.mxu0 0.0
    %1129 = vmatpush1.xpose.msra.mxu0 0.0
    %1130 = vmatprep.subr.mxu0 0.0
    %1131 = vmatpush1.xpose.msra.mxu0 0.0
    %1132 = vmatprep.subr.mxu0 0.0
    %1133 = vmatpush1.xpose.msra.mxu0 0.0
    %1134 = vmatprep.subr.mxu0 0.0
    %1135 = vmatpush1.xpose.msra.mxu0 0.0
    %1136 = vmatprep.subr.mxu0 0.0
    %1137 = vmatpush1.xpose.msra.mxu0 0.0
    %1138 = vmatprep.subr.mxu0 0.0
    %1139 = vmatpush1.xpose.msra.mxu0 0.0
    %1140 = vmatprep.subr.mxu0 0.0
    %1141 = vmatpush1.xpose.msra.mxu0 0.0
    %1142 = vmatprep.subr.mxu0 0.0
    %1143 = vmatpush1.xpose.msra.mxu0 0.0
    %1144 = vmatprep.subr.mxu0 0.0
    %1145 = vmatpush1.xpose.msra.mxu0 0.0
    %1146 = vmatprep.subr.mxu0 0.0
    %1147 = vmatpush1.xpose.msra.mxu0 0.0
    %1148 = vmatprep.mubr.f32.mxu0 %v586
    %1149 = vmatmul.mubr.f32.gmra.mrb[0].mxu0 %v584
    %v1150 = vpop.f32.mrb[0].mxu0
    %v1151 = vadd.f32 0.0, %v1150
    %v1152 = vpop.f32.mrb[0].mxu0
    %1153 = vdwg.mxu0
    %s1154 = sld [smem:[#allocation2]]
    %v1155 = vstv %s1154
    %v1156 = vmul.f32 %v1151, %v1155
    %vm1157 = vcmask 64512
    %v1158 = vsel %vm1157, %v1156, -inf
    %1159 = vmax.xlane.f32.xlu0 %v1158
    %v1160 = vpop.xlane.xlu0 %1159
    %v1161 = vsub.f32 %v1156, %v1160
    %v1162 = vmul.f32 %v1161, 1.442695
    %v1163 = vpow.pop %v1162
    %v1164 = vsel %vm1157, %v1163, 0.0
    %1165 = vadd.xlane.f32.xlu0 %v1164
    %v1166 = vpop.xlane.xlu0 %1165
    %v1167 = vrcp.pop %v1166
    %v1168 = vmul.f32 %v1163, %v1167
    %v1169 = vld [vmem:[%s8] sm:$0xff]
    %v1170 = vmul.f32 %v1168, %v1169
    %v1171 = vld [vmem:[#allocation8] sm:$0xff]
    %v1172 = vld [vmem:[#allocation8 + $0x8] sm:$0xff]
    %v1174 = vsel %vm1157, %v1170, 0
    %1176 = vmatprep.subr.mxu0 %v1172
    %1177 = vmatpush1.msra.mxu0 %v1171
    %1178 = vmatprep.subr.mxu0 0.0
    %1179 = vmatpush1.msra.mxu0 0.0
    %1180 = vmatprep.subr.mxu0 0.0
    %1181 = vmatpush1.msra.mxu0 0.0
    %1182 = vmatprep.subr.mxu0 0.0
    %1183 = vmatpush1.msra.mxu0 0.0
    %1184 = vmatprep.subr.mxu0 0.0
    %1185 = vmatpush1.msra.mxu0 0.0
    %1186 = vmatprep.subr.mxu0 0.0
    %1187 = vmatpush1.msra.mxu0 0.0
    %1188 = vmatprep.subr.mxu0 0.0
    %1189 = vmatpush1.msra.mxu0 0.0
    %1190 = vmatprep.subr.mxu0 0.0
    %1191 = vmatpush1.msra.mxu0 0.0
    %1192 = vmatprep.subr.mxu0 0.0
    %1193 = vmatpush1.msra.mxu0 0.0
    %1194 = vmatprep.subr.mxu0 0.0
    %1195 = vmatpush1.msra.mxu0 0.0
    %1196 = vmatprep.subr.mxu0 0.0
    %1197 = vmatpush1.msra.mxu0 0.0
    %1198 = vmatprep.subr.mxu0 0.0
    %1199 = vmatpush1.msra.mxu0 0.0
    %1200 = vmatprep.subr.mxu0 0.0
    %1201 = vmatpush1.msra.mxu0 0.0
    %1202 = vmatprep.subr.mxu0 0.0
    %1203 = vmatpush1.msra.mxu0 0.0
    %1204 = vmatprep.subr.mxu0 0.0
    %1205 = vmatpush1.msra.mxu0 0.0
    %1206 = vmatprep.subr.mxu0 0.0
    %1207 = vmatpush1.msra.mxu0 0.0
    %1208 = vmatprep.subr.mxu0 0.0
    %1209 = vmatpush1.msra.mxu0 0.0
    %1210 = vmatprep.subr.mxu0 0.0
    %1211 = vmatpush1.msra.mxu0 0.0
    %1212 = vmatprep.subr.mxu0 0.0
    %1213 = vmatpush1.msra.mxu0 0.0
    %1214 = vmatprep.subr.mxu0 0.0
    %1215 = vmatpush1.msra.mxu0 0.0
    %1216 = vmatprep.subr.mxu0 0.0
    %1217 = vmatpush1.msra.mxu0 0.0
    %1218 = vmatprep.subr.mxu0 0.0
    %1219 = vmatpush1.msra.mxu0 0.0
    %1220 = vmatprep.subr.mxu0 0.0
    %1221 = vmatpush1.msra.mxu0 0.0
    %1222 = vmatprep.subr.mxu0 0.0
    %1223 = vmatpush1.msra.mxu0 0.0
    %1224 = vmatprep.subr.mxu0 0.0
    %1225 = vmatpush1.msra.mxu0 0.0
    %1226 = vmatprep.subr.mxu0 0.0
    %1227 = vmatpush1.msra.mxu0 0.0
    %1228 = vmatprep.subr.mxu0 0.0
    %1229 = vmatpush1.msra.mxu0 0.0
    %1230 = vmatprep.subr.mxu0 0.0
    %1231 = vmatpush1.msra.mxu0 0.0
    %1232 = vmatprep.subr.mxu0 0.0
    %1233 = vmatpush1.msra.mxu0 0.0
    %1234 = vmatprep.subr.mxu0 0.0
    %1235 = vmatpush1.msra.mxu0 0.0
    %1236 = vmatprep.subr.mxu0 0.0
    %1237 = vmatpush1.msra.mxu0 0.0
    %1238 = vmatprep.subr.mxu0 0.0
    %1239 = vmatpush1.msra.mxu0 0.0
    %1240 = vmatprep.mubr.f32.mxu0 0.0
    %1241 = vmatmul.mubr.f32.gmra.mrb[0].mxu0 %v1174
    %v1242 = vpop.f32.mrb[0].mxu0
    %v1243 = vadd.f32 0.0, %v1242
    %v1244 = vpop.f32.mrb[0].mxu0
    %v1245 = vadd.f32 0.0, %v1244
    %1246 = vdwg.mxu0
    %1247 = vst [vmem:[#allocation12] sm:$0xff] %v1243
    %1248 = vst [vmem:[#allocation12 + $0x8] sm:$0xff] %v1245
    // Predicated region
    $region58: #{tpu_custom_call.1} parent=1 // pred_check
      _
    $region59: #{tpu_custom_call.1} parent=1 // pred_check_branch
      %1250 = sbr.rel (0) target = $region61
    $region60: #{tpu_custom_call.1} parent=1 // pred_region
      %s1252 = ssub.s32 256, 256
      %1253 = vsyncadd [#allocation5], %s1252
      %s1255 = sshll.u32 [#allocation12], 4
      %s1256 = int_to_ptr.vmem [resolvable:$true] %s1255
      %1258 = dma.vmem_to_hbm [thread:$0]  %s1256, 256, %s9, [#allocation5]
    $region61: #{tpu_custom_call.1} parent=1 // pred_fallthru
      _
    // Predicated region
    $region62: #{tpu_custom_call.1} parent=1 // pred_check
      _
    $region63: #{tpu_custom_call.1} parent=1 // pred_check_branch
      %1260 = sbr.rel (0) target = $region65
    $region64: #{tpu_custom_call.1} parent=1 // pred_region
      %1261 = dma.done [#allocation5], 256
    $region65: #{tpu_custom_call.1} parent=1 // pred_fallthru
      _
    %1262 = vsyncpa [#allocation4], 1
    %1263 = vsyncpa [#allocation7], 1
    %1264 = vsyncpa [#allocation10], 1
    %1265 = vsyncpa [#allocation5], 1

</llo_original>
